<compile_context>
chip_gen: v6e
topology: v6e:2x2x1
jax: 0.10.0
libtpu: 0.0.40
codegen_flags: <defaults>
</compile_context>

<pallas_src>
import functools

import jax
import jax.numpy as jnp
from jax import lax
from jax.experimental import pallas as pl
from jax.experimental.pallas import tpu as pltpu

HIDDEN = 768          # fixed by the module (BERT / CLIP hidden size)
NUM_LABELS = 4
HEAD_TOKEN_ID = 101   # stand-in id for '<s>'
TAIL_TOKEN_ID = 102   # stand-in id for '<o>'
LANE = 128            # label axis padded to one full lane tile
MAX_BATCH_TILE = 256  # rows per grid step (cap)


def _round_up(x, m):
    return ((x + m - 1) // m) * m


def _cdiv(a, b):
    return -(-a // b)


def _batch_tiling(batch):
    """Pick (batch_tile, padded_batch).  >=2 grid steps when batch >= 16 (v7x 2 TCs)."""
    b8 = _round_up(batch, 8)
    n_steps = max(_cdiv(b8, MAX_BATCH_TILE), 2 if b8 >= 16 else 1)
    tb = _round_up(_cdiv(b8, n_steps), 8)
    return tb, tb * n_steps


def fusion_kernel(head_idx_ref, tail_idx_ref,        # scalar prefetch (SMEM), (B_pad,)
                  hidden_hbm,                         # (B, S, H) HBM (pl.ANY), native dtype
                  image_ref,                          # (TB, H)  bf16, VMEM
                  w_text_ref, w_img_ref,              # (H, LP)  bf16, VMEM
                  b_ref,                              # (1, LP)  f32,  VMEM
                  logits_ref,                         # (TB, LP) f32 output
                  rows_buf, sem,                      # scratch: (2,TB,H) + DMA sems
                  *, tb, num_batch):
    bt = pl.program_id(0)
    base = bt * tb
    # rows of this tile that are real batch rows (padded rows issue no DMA at all)
    n_real = jnp.minimum(num_batch - base, tb)

    # ---- start row-gather DMAs: only hidden_states[b, head/tail idx, :] ----
    def start_row(r, carry):
        b = base + r
        pltpu.make_async_copy(
            hidden_hbm.at[b, pl.ds(head_idx_ref[b], 1), :],
            rows_buf.at[0, pl.ds(r, 1), :], sem.at[0, r]).start()
        pltpu.make_async_copy(
            hidden_hbm.at[b, pl.ds(tail_idx_ref[b], 1), :],
            rows_buf.at[1, pl.ds(r, 1), :], sem.at[1, r]).start()
        return carry
    lax.fori_loop(0, n_real, start_row, 0)

    # ---- overlap: image-side matmul + bias while the gather DMAs are in flight ----
    img_part = (jnp.dot(image_ref[...], w_img_ref[...],
                        preferred_element_type=jnp.float32)
                + b_ref[...])                                   # (TB, LP) f32

    # ---- wait for the gathered rows of this tile ----
    def wait_row(r, carry):
        pltpu.make_async_copy(hidden_hbm.at[0, pl.ds(0, 1), :],
                              rows_buf.at[0, pl.ds(r, 1), :], sem.at[0, r]).wait()
        pltpu.make_async_copy(hidden_hbm.at[0, pl.ds(0, 1), :],
                              rows_buf.at[1, pl.ds(r, 1), :], sem.at[1, r]).wait()
        return carry
    lax.fori_loop(0, n_real, wait_row, 0)

    # TODO(synk): nn.Dropout(0.3) is stochastic in train mode; treated as identity (eval).
    text = ((rows_buf[0] + rows_buf[1]) * 0.5).astype(jnp.bfloat16)   # (TB, H)

    # classifier on concat([text, image]) == text @ W[:H] + image @ W[H:] + b
    logits_ref[...] = img_part + jnp.dot(text, w_text_ref[...],
                                         preferred_element_type=jnp.float32)


def bert_clip_fusion_forward(input_ids, hidden_states, image_features,
                             classifier_w, classifier_b, labels=None,
                             head_id=HEAD_TOKEN_ID, tail_id=TAIL_TOKEN_ID):
    B, S = input_ids.shape
    H = hidden_states.shape[-1]
    L = classifier_w.shape[1]
    LP = LANE
    TB, B_pad = _batch_tiling(B)

    # first occurrence of the token, 0 fallback when absent (== torch loop semantics)
    head_idx = jnp.argmax(input_ids == jnp.int32(head_id), axis=1).astype(jnp.int32)
    tail_idx = jnp.argmax(input_ids == jnp.int32(tail_id), axis=1).astype(jnp.int32)
    head_idx = jnp.pad(head_idx, (0, B_pad - B))
    tail_idx = jnp.pad(tail_idx, (0, B_pad - B))

    # hidden_states stays in HBM in its native dtype (only 2 rows/example are read)
    image_p = jnp.pad(image_features.astype(jnp.bfloat16), ((0, B_pad - B), (0, 0)))

    w = classifier_w.astype(jnp.bfloat16)
    w_text = jnp.pad(w[:H], ((0, 0), (0, LP - L)))                    # (H, 128)
    w_img = jnp.pad(w[H:], ((0, 0), (0, LP - L)))                     # (H, 128)
    bias = jnp.pad(classifier_b.reshape(1, L).astype(jnp.float32), ((0, 0), (0, LP - L)))

    kernel = functools.partial(fusion_kernel, tb=TB, num_batch=B)

    logits_p = pl.pallas_call(
        kernel,
        out_shape=jax.ShapeDtypeStruct((B_pad, LP), jnp.float32),
        grid_spec=pltpu.PrefetchScalarGridSpec(
            num_scalar_prefetch=2,
            grid=(B_pad // TB,),
            in_specs=[
                pl.BlockSpec(memory_space=pl.ANY),                     # hidden (HBM)
                pl.BlockSpec((TB, H), lambda bt, hi, ti: (bt, 0)),     # image
                pl.BlockSpec((H, LP), lambda bt, hi, ti: (0, 0)),      # W[:H]
                pl.BlockSpec((H, LP), lambda bt, hi, ti: (0, 0)),      # W[H:]
                pl.BlockSpec((1, LP), lambda bt, hi, ti: (0, 0)),      # bias
            ],
            out_specs=pl.BlockSpec((TB, LP), lambda bt, hi, ti: (bt, 0)),
            scratch_shapes=[
                pltpu.VMEM((2, TB, H), hidden_states.dtype),           # gathered rows
                pltpu.SemaphoreType.DMA((2, TB)),
            ],
        ),
        compiler_params=pltpu.CompilerParams(
            dimension_semantics=("parallel",)),
    )(head_idx, tail_idx, hidden_states, image_p, w_text, w_img, bias)

    logits = logits_p[:B, :L]
    probs = jax.nn.softmax(logits, axis=-1)

    if labels is not None:
        # CrossEntropyLoss computed from log-softmax of the LOGITS (not probs)
        logz = jax.nn.log_softmax(logits, axis=-1)
        picked = jnp.take_along_axis(logz, labels.reshape(-1, 1), axis=-1)
        loss = -jnp.mean(picked)
        return loss, probs
    return probs


# --------------------------------------------------------------------------
# Deterministic stand-in encoders (plain-JAX glue).
# TODO(synk): pretrained BertModel / CLIP vision transformer are not
# re-implementable from the module code; replaced by deterministic stubs
# that produce tensors of the exact shapes the fusion head consumes.
# --------------------------------------------------------------------------
def bert_stub(input_ids, embedding_table):
    # "last_hidden_state": (B, S, 768)
    return embedding_table[input_ids]


def clip_vision_stub(pixel_values, w_vision):
    # "pooler_output": (B, 768).  pixel_values is NCHW (B, 3, 16, 16).
    B = pixel_values.shape[0]
    flat = pixel_values.reshape(B, -1)              # (B, 3*16*16) = (B, 768)
    return jnp.tanh(flat @ w_vision)                # (B, 768)


if __name__ == "__main__":
    B, S, VOCAB = 2, 8, 1000

    key = jax.random.PRNGKey(0)
    k_ids, k_emb, k_pix, k_wv, k_wc, k_bc = jax.random.split(key, 6)

    # token ids; batch 0 contains both <s> and <o>, batch 1 has neither
    # (exercises the "fall back to position 0" branch of the torch loop).
    input_ids = jax.random.randint(k_ids, (B, S), 200, VOCAB, dtype=jnp.int32)
    input_ids = input_ids.at[0, 2].set(HEAD_TOKEN_ID)
    input_ids = input_ids.at[0, 5].set(TAIL_TOKEN_ID)

    # deterministic parameters
    embedding_table = 0.02 * jax.random.normal(k_emb, (VOCAB, HIDDEN), jnp.float32)
    pixel_values = jax.random.normal(k_pix, (B, 3, 16, 16), jnp.float32)   # NCHW
    w_vision = 0.02 * jax.random.normal(k_wv, (3 * 16 * 16, HIDDEN), jnp.float32)
    classifier_w = 0.02 * jax.random.normal(k_wc, (2 * HIDDEN, NUM_LABELS), jnp.float32)
    classifier_b = 0.02 * jax.random.normal(k_bc, (NUM_LABELS,), jnp.float32)

    # stand-in encoder outputs
    hidden_states = bert_stub(input_ids, embedding_table)        # (B, S, 768)
    image_features = clip_vision_stub(pixel_values, w_vision)    # (B, 768)

    probs = bert_clip_fusion_forward(
        input_ids, hidden_states, image_features, classifier_w, classifier_b)
    probs = jax.block_until_ready(probs)

    assert probs.shape == (B, NUM_LABELS)
    assert bool(jnp.all(jnp.isfinite(probs)))
    assert bool(jnp.allclose(jnp.sum(probs, axis=-1), 1.0, atol=1e-3))

    # plain-JAX f32 reference of the fusion head (tolerance covers bf16 matmul)
    hi = jnp.argmax(input_ids == HEAD_TOKEN_ID, axis=1)
    ti = jnp.argmax(input_ids == TAIL_TOKEN_ID, axis=1)
    text_ref = (hidden_states[jnp.arange(B), hi] + hidden_states[jnp.arange(B), ti]) / 2
    comb = jnp.concatenate([text_ref, image_features], axis=-1)
    ref_probs = jax.nn.softmax(comb @ classifier_w + classifier_b, axis=-1)
    assert bool(jnp.allclose(probs, ref_probs, atol=5e-2))

    # optional labels branch (loss, probs), like the torch module
    labels = jnp.array([1, 3], dtype=jnp.int32)
    loss, probs2 = bert_clip_fusion_forward(
        input_ids, hidden_states, image_features, classifier_w, classifier_b,
        labels=labels)
    loss, probs2 = jax.block_until_ready((loss, probs2))
    assert bool(jnp.isfinite(loss))

    print("KERNEL_OK")
</pallas_src>

<mosaic_0001>
module attributes {stable_mosaic.version = 11 : i64} {
  func.func @fusion_kernel(%arg0: i32, %arg1: memref<8xi32, #tpu.memory_space<smem>>, %arg2: memref<8xi32, #tpu.memory_space<smem>>, %arg3: memref<2x8x768xf32, #tpu.memory_space<any>>, %arg4: memref<8x768xbf16, #tpu.memory_space<vmem>>, %arg5: memref<768x128xbf16, #tpu.memory_space<vmem>>, %arg6: memref<768x128xbf16, #tpu.memory_space<vmem>>, %arg7: memref<1x128xf32, #tpu.memory_space<vmem>>, %arg8: memref<8x128xf32, #tpu.memory_space<vmem>>, %arg9: memref<2x8x768xf32, #tpu.memory_space<vmem>>, %arg10: memref<2x8x!tpu.dma_semaphore, #tpu.memory_space<semaphore_mem>>) attributes {dimension_semantics = [#tpu.dimension_semantics<parallel>], iteration_bounds = array<i64: 1>, scalar_prefetch = 2 : i64, scratch_operands = 2 : i64, tpu.core_type = #tpu.core_type<tc>, window_params = [{}, {transform_indices = @transform_1, window_bounds = array<i64: 8, 768>}, {pipeline_mode = #tpu.pipeline_mode<synchronous>, transform_indices = @transform_2, window_bounds = array<i64: 768, 128>}, {pipeline_mode = #tpu.pipeline_mode<synchronous>, transform_indices = @transform_3, window_bounds = array<i64: 768, 128>}, {pipeline_mode = #tpu.pipeline_mode<synchronous>, transform_indices = @transform_4, window_bounds = array<i64: 1, 128>}, {transform_indices = @transform_5, window_bounds = array<i64: 8, 128>}]} {
    %c8_i32 = arith.constant 8 : i32
    %0 = arith.muli %arg0, %c8_i32 : i32
    %c2_i32 = arith.constant 2 : i32
    %1 = arith.subi %c2_i32, %0 : i32
    %c8_i32_0 = arith.constant 8 : i32
    %2 = arith.minsi %1, %c8_i32_0 : i32
    %c0_i32 = arith.constant 0 : i32
    %c0_i32_1 = arith.constant 0 : i32
    %3 = arith.subi %2, %c0_i32_1 : i32
    %4 = arith.addi %c0_i32_1, %3 : i32
    %c1_i32 = arith.constant 1 : i32
    scf.for %arg11 = %c0_i32_1 to %4 step %c1_i32  : i32 {
      %25 = arith.addi %0, %arg11 : i32
      %26 = arith.index_cast %25 : i32 to index
      %27 = memref.load %arg1[%26] : memref<8xi32, #tpu.memory_space<smem>>
      %c0_i32_21 = arith.constant 0 : i32
      %c0_i32_22 = arith.constant 0 : i32
      %c0_i32_23 = arith.constant 0 : i32
      %28 = tpu.memref_slice %arg3[%25, %27, %c0_i32_23] : memref<2x8x768xf32, #tpu.memory_space<any>> -> memref<1x1x768xf32, #tpu.memory_space<any>>
      %29 = tpu.memref_squeeze %28 : memref<1x1x768xf32, #tpu.memory_space<any>> -> memref<1x768xf32, #tpu.memory_space<any>>
      %c0_i32_24 = arith.constant 0 : i32
      %30 = tpu.memref_slice %arg9[%c0_i32_21, %arg11, %c0_i32_24] : memref<2x8x768xf32, #tpu.memory_space<vmem>> -> memref<1x1x768xf32, #tpu.memory_space<vmem>>
      %31 = tpu.memref_squeeze %30 : memref<1x1x768xf32, #tpu.memory_space<vmem>> -> memref<1x768xf32, #tpu.memory_space<vmem>>
      %32 = tpu.memref_slice %arg10[%c0_i32_22, %arg11] : memref<2x8x!tpu.dma_semaphore, #tpu.memory_space<semaphore_mem>> -> memref<1x1x!tpu.dma_semaphore, #tpu.memory_space<semaphore_mem>>
      %33 = tpu.memref_squeeze %32 : memref<1x1x!tpu.dma_semaphore, #tpu.memory_space<semaphore_mem>> -> memref<!tpu.dma_semaphore, #tpu.memory_space<semaphore_mem>>
      tpu.enqueue_dma source(%29 : memref<1x768xf32, #tpu.memory_space<any>>) target(%31 : memref<1x768xf32, #tpu.memory_space<vmem>>) target_semaphore(%33 : memref<!tpu.dma_semaphore, #tpu.memory_space<semaphore_mem>>)
      %34 = arith.index_cast %25 : i32 to index
      %35 = memref.load %arg2[%34] : memref<8xi32, #tpu.memory_space<smem>>
      %c1_i32_25 = arith.constant 1 : i32
      %c1_i32_26 = arith.constant 1 : i32
      %c0_i32_27 = arith.constant 0 : i32
      %36 = tpu.memref_slice %arg3[%25, %35, %c0_i32_27] : memref<2x8x768xf32, #tpu.memory_space<any>> -> memref<1x1x768xf32, #tpu.memory_space<any>>
      %37 = tpu.memref_squeeze %36 : memref<1x1x768xf32, #tpu.memory_space<any>> -> memref<1x768xf32, #tpu.memory_space<any>>
      %c0_i32_28 = arith.constant 0 : i32
      %38 = tpu.memref_slice %arg9[%c1_i32_25, %arg11, %c0_i32_28] : memref<2x8x768xf32, #tpu.memory_space<vmem>> -> memref<1x1x768xf32, #tpu.memory_space<vmem>>
      %39 = tpu.memref_squeeze %38 : memref<1x1x768xf32, #tpu.memory_space<vmem>> -> memref<1x768xf32, #tpu.memory_space<vmem>>
      %40 = tpu.memref_slice %arg10[%c1_i32_26, %arg11] : memref<2x8x!tpu.dma_semaphore, #tpu.memory_space<semaphore_mem>> -> memref<1x1x!tpu.dma_semaphore, #tpu.memory_space<semaphore_mem>>
      %41 = tpu.memref_squeeze %40 : memref<1x1x!tpu.dma_semaphore, #tpu.memory_space<semaphore_mem>> -> memref<!tpu.dma_semaphore, #tpu.memory_space<semaphore_mem>>
      tpu.enqueue_dma source(%37 : memref<1x768xf32, #tpu.memory_space<any>>) target(%39 : memref<1x768xf32, #tpu.memory_space<vmem>>) target_semaphore(%41 : memref<!tpu.dma_semaphore, #tpu.memory_space<semaphore_mem>>)
    }
    %c0 = arith.constant 0 : index
    %c0_2 = arith.constant 0 : index
    %5 = vector.load %arg4[%c0, %c0_2] : memref<8x768xbf16, #tpu.memory_space<vmem>>, vector<8x768xbf16>
    %c0_3 = arith.constant 0 : index
    %c0_4 = arith.constant 0 : index
    %6 = vector.load %arg6[%c0_3, %c0_4] : memref<768x128xbf16, #tpu.memory_space<vmem>>, vector<768x128xbf16>
    %cst = arith.constant dense<0.000000e+00> : vector<8x128xf32>
    %7 = tpu.matmul %5, %6, %cst {dimension_numbers = #tpu.dot_dimension_numbers<[1], [0], [0], [1], [0, 0, 1, 1], [], []>} : vector<8x768xbf16>, vector<768x128xbf16>, vector<8x128xf32> -> vector<8x128xf32>
    %c0_5 = arith.constant 0 : index
    %c0_6 = arith.constant 0 : index
    %8 = vector.load %arg7[%c0_5, %c0_6] : memref<1x128xf32, #tpu.memory_space<vmem>>, vector<1x128xf32>
    %9 = vector.broadcast %8 : vector<1x128xf32> to vector<8x128xf32>
    %10 = arith.addf %7, %9 : vector<8x128xf32>
    %c0_i32_7 = arith.constant 0 : i32
    %c0_i32_8 = arith.constant 0 : i32
    %11 = arith.subi %2, %c0_i32_8 : i32
    %12 = arith.addi %c0_i32_8, %11 : i32
    %c1_i32_9 = arith.constant 1 : i32
    scf.for %arg11 = %c0_i32_8 to %12 step %c1_i32_9  : i32 {
      %c0_i32_21 = arith.constant 0 : i32
      %c0_i32_22 = arith.constant 0 : i32
      %c0_i32_23 = arith.constant 0 : i32
      %c0_i32_24 = arith.constant 0 : i32
      %c0_i32_25 = arith.constant 0 : i32
      %25 = tpu.memref_slice %arg3[%c0_i32_21, %c0_i32_24, %c0_i32_25] : memref<2x8x768xf32, #tpu.memory_space<any>> -> memref<1x1x768xf32, #tpu.memory_space<any>>
      %26 = tpu.memref_squeeze %25 : memref<1x1x768xf32, #tpu.memory_space<any>> -> memref<1x768xf32, #tpu.memory_space<any>>
      %c0_i32_26 = arith.constant 0 : i32
      %27 = tpu.memref_slice %arg9[%c0_i32_22, %arg11, %c0_i32_26] : memref<2x8x768xf32, #tpu.memory_space<vmem>> -> memref<1x1x768xf32, #tpu.memory_space<vmem>>
      %28 = tpu.memref_squeeze %27 : memref<1x1x768xf32, #tpu.memory_space<vmem>> -> memref<1x768xf32, #tpu.memory_space<vmem>>
      %29 = tpu.memref_slice %arg10[%c0_i32_23, %arg11] : memref<2x8x!tpu.dma_semaphore, #tpu.memory_space<semaphore_mem>> -> memref<1x1x!tpu.dma_semaphore, #tpu.memory_space<semaphore_mem>>
      %30 = tpu.memref_squeeze %29 : memref<1x1x!tpu.dma_semaphore, #tpu.memory_space<semaphore_mem>> -> memref<!tpu.dma_semaphore, #tpu.memory_space<semaphore_mem>>
      tpu.wait_dma2 semaphore(%30 : memref<!tpu.dma_semaphore, #tpu.memory_space<semaphore_mem>>) src(%26 : memref<1x768xf32, #tpu.memory_space<any>>) dst(%28 : memref<1x768xf32, #tpu.memory_space<vmem>>)
      %c0_i32_27 = arith.constant 0 : i32
      %c1_i32_28 = arith.constant 1 : i32
      %c1_i32_29 = arith.constant 1 : i32
      %c0_i32_30 = arith.constant 0 : i32
      %c0_i32_31 = arith.constant 0 : i32
      %31 = tpu.memref_slice %arg3[%c0_i32_27, %c0_i32_30, %c0_i32_31] : memref<2x8x768xf32, #tpu.memory_space<any>> -> memref<1x1x768xf32, #tpu.memory_space<any>>
      %32 = tpu.memref_squeeze %31 : memref<1x1x768xf32, #tpu.memory_space<any>> -> memref<1x768xf32, #tpu.memory_space<any>>
      %c0_i32_32 = arith.constant 0 : i32
      %33 = tpu.memref_slice %arg9[%c1_i32_28, %arg11, %c0_i32_32] : memref<2x8x768xf32, #tpu.memory_space<vmem>> -> memref<1x1x768xf32, #tpu.memory_space<vmem>>
      %34 = tpu.memref_squeeze %33 : memref<1x1x768xf32, #tpu.memory_space<vmem>> -> memref<1x768xf32, #tpu.memory_space<vmem>>
      %35 = tpu.memref_slice %arg10[%c1_i32_29, %arg11] : memref<2x8x!tpu.dma_semaphore, #tpu.memory_space<semaphore_mem>> -> memref<1x1x!tpu.dma_semaphore, #tpu.memory_space<semaphore_mem>>
      %36 = tpu.memref_squeeze %35 : memref<1x1x!tpu.dma_semaphore, #tpu.memory_space<semaphore_mem>> -> memref<!tpu.dma_semaphore, #tpu.memory_space<semaphore_mem>>
      tpu.wait_dma2 semaphore(%36 : memref<!tpu.dma_semaphore, #tpu.memory_space<semaphore_mem>>) src(%32 : memref<1x768xf32, #tpu.memory_space<any>>) dst(%34 : memref<1x768xf32, #tpu.memory_space<vmem>>)
    }
    %c0_10 = arith.constant 0 : index
    %c0_11 = arith.constant 0 : index
    %c0_12 = arith.constant 0 : index
    %13 = vector.load %arg9[%c0_10, %c0_11, %c0_12] : memref<2x8x768xf32, #tpu.memory_space<vmem>>, vector<1x8x768xf32>
    %14 = vector.shape_cast %13 : vector<1x8x768xf32> to vector<8x768xf32>
    %c1 = arith.constant 1 : index
    %c0_13 = arith.constant 0 : index
    %c0_14 = arith.constant 0 : index
    %15 = vector.load %arg9[%c1, %c0_13, %c0_14] : memref<2x8x768xf32, #tpu.memory_space<vmem>>, vector<1x8x768xf32>
    %16 = vector.shape_cast %15 : vector<1x8x768xf32> to vector<8x768xf32>
    %17 = arith.addf %14, %16 : vector<8x768xf32>
    %cst_15 = arith.constant 5.000000e-01 : f32
    %18 = vector.broadcast %cst_15 : f32 to vector<8x768xf32>
    %19 = arith.mulf %17, %18 : vector<8x768xf32>
    %20 = arith.truncf %19 : vector<8x768xf32> to vector<8x768xbf16>
    %c0_16 = arith.constant 0 : index
    %c0_17 = arith.constant 0 : index
    %21 = vector.load %arg5[%c0_16, %c0_17] : memref<768x128xbf16, #tpu.memory_space<vmem>>, vector<768x128xbf16>
    %cst_18 = arith.constant dense<0.000000e+00> : vector<8x128xf32>
    %22 = tpu.matmul %20, %21, %cst_18 {dimension_numbers = #tpu.dot_dimension_numbers<[1], [0], [0], [1], [0, 0, 1, 1], [], []>} : vector<8x768xbf16>, vector<768x128xbf16>, vector<8x128xf32> -> vector<8x128xf32>
    %23 = arith.addf %10, %22 : vector<8x128xf32>
    %c0_19 = arith.constant 0 : index
    %c0_20 = arith.constant 0 : index
    %24 = vector.load %arg8[%c0_19, %c0_20] : memref<8x128xf32, #tpu.memory_space<vmem>>, vector<8x128xf32>
    tpu.vector_store %arg8[%c0_19, %c0_20], %23 {strides = array<i32>} : memref<8x128xf32, #tpu.memory_space<vmem>>, vector<8x128xf32>,
    return
  }
  func.func @transform_1(%arg0: i32, %arg1: memref<8xi32, #tpu.memory_space<smem>>, %arg2: memref<8xi32, #tpu.memory_space<smem>>) -> (i32, i32) {
    %c0_i32 = arith.constant 0 : i32
    %c0_i32_0 = arith.constant 0 : i32
    return %arg0, %c0_i32 : i32, i32
  }
  func.func @transform_2(%arg0: i32, %arg1: memref<8xi32, #tpu.memory_space<smem>>, %arg2: memref<8xi32, #tpu.memory_space<smem>>) -> (i32, i32) {
    %c0_i32 = arith.constant 0 : i32
    %c0_i32_0 = arith.constant 0 : i32
    %c0_i32_1 = arith.constant 0 : i32
    return %c0_i32, %c0_i32_0 : i32, i32
  }
  func.func @transform_3(%arg0: i32, %arg1: memref<8xi32, #tpu.memory_space<smem>>, %arg2: memref<8xi32, #tpu.memory_space<smem>>) -> (i32, i32) {
    %c0_i32 = arith.constant 0 : i32
    %c0_i32_0 = arith.constant 0 : i32
    %c0_i32_1 = arith.constant 0 : i32
    return %c0_i32, %c0_i32_0 : i32, i32
  }
  func.func @transform_4(%arg0: i32, %arg1: memref<8xi32, #tpu.memory_space<smem>>, %arg2: memref<8xi32, #tpu.memory_space<smem>>) -> (i32, i32) {
    %c0_i32 = arith.constant 0 : i32
    %c0_i32_0 = arith.constant 0 : i32
    %c0_i32_1 = arith.constant 0 : i32
    return %c0_i32, %c0_i32_0 : i32, i32
  }
  func.func @transform_5(%arg0: i32, %arg1: memref<8xi32, #tpu.memory_space<smem>>, %arg2: memref<8xi32, #tpu.memory_space<smem>>) -> (i32, i32) {
    %c0_i32 = arith.constant 0 : i32
    %c0_i32_0 = arith.constant 0 : i32
    return %arg0, %c0_i32 : i32, i32
  }
}

</mosaic_0001>

<llo_original>
// kernel: tpu_custom_call.1
$region0: #{tpu_custom_call.1}
  #allocation0 [shape = 'u32[]', space=smem, size = 0x4, offset = 0x4, fixed_abs, tag = 'smem constant byte address 0x4 - core index']
  #allocation1 [shape = 'u32[144,128]{1,0:T(1,128)}', space=vmem, size = 0x12000, scoped, tag = 'internal scratch']
  #allocation2 [shape = 'f32[2,8,768]{2,1,0:T(8,128)}', space=vmem, size = 0xc000, scoped, tag = 'scratch operand']
  #allocation3 [shape = 's32[16]{0}', space=sflag, size = 0x40, scoped, tag = 'scratch operand']
  #allocation4 [shape = 's32[1]{0}', space=sflag, size = 0x4, scoped, tag = 'scoped memory for tpu_custom_call.1']
  #allocation5 [shape = 'u8[512]{0}', space=smem, size = 0x200, scoped, tag = 'prefetched SMEM operand 0']
  #allocation6 [shape = 'u8[512]{0}', space=smem, size = 0x200, scoped, tag = 'prefetched SMEM operand 1']
  #allocation14 [shape = 's32[]', space=sflag, size = 0x4, offset = 0, fixed_abs, tag = 'sflag constant byte address 0x0 - dummy sync flag']
  #allocation15 [shape = 's32[]', space=sflag, size = 0x4, offset = 0, fixed_abs, tag = 'sflag constant byte address 0x0 - dummy sync flag']
  %s0 = inlined_call_operand.hbm [shape: s32[8], index: 0, kind: input, shape index: {}]
  %s1 = inlined_call_operand.vmem [shape: s32[8], index: 1, kind: input, shape index: {}]
  %s2 = inlined_call_operand.hbm [shape: f32[2,8,768], index: 2, kind: input, shape index: {}]
  %s3 = inlined_call_operand.hbm [shape: bf16[8,768], index: 3, kind: input, shape index: {}]
  %s4 = inlined_call_operand.hbm [shape: bf16[768,128], index: 4, kind: input, shape index: {}]
  %s5 = inlined_call_operand.hbm [shape: bf16[768,128], index: 5, kind: input, shape index: {}]
  %s6 = inlined_call_operand.vmem [shape: f32[1,128], index: 6, kind: input, shape index: {}]
  %s7 = inlined_call_operand.hbm [shape: f32[8,128], index: 7, kind: output, shape index: {}]
  %s8 = sld [smem:[#allocation0]]
  $region52: #{tpu_custom_call.1} parent=0
    _
  %s10 = ssub.s32 1, %s8
  %s11 = scalar_select 0, %s10, %s8
  %13 = dma.hbm_to_smem %s0, 16, [#allocation5], [#allocation4]
  %s14 = sshll.u32 %s1, 4
  %s15 = int_to_ptr.vmem [resolvable:$true] %s14
  %17 = dma.vmem_to_smem %s15, 16, [#allocation6], [#allocation4]
  %18 = dma.done [#allocation4], 32
  %19 = sfence
  $region1: #{tpu_custom_call.1} parent=0
    #allocation7 [shape = 'u8[12288]{0}', space=vmem, size = 0x3000, scoped, tag = 'input window, operand 3, single buffered']
    #allocation8 [shape = 's32[1]{0}', space=sflag, size = 0x4, scoped, tag = 'scoped memory for tpu_custom_call.1']
    #allocation9 [shape = 's32[1]{0}', space=sflag, size = 0x4, scoped, tag = 'scoped memory for tpu_custom_call.1']
    #allocation10 [shape = 'u8[196608]{0}', space=vmem, size = 0x30000, scoped, tag = 'input window, operand 4, single buffered']
    #allocation11 [shape = 's32[1]{0}', space=sflag, size = 0x4, scoped, tag = 'scoped memory for tpu_custom_call.1']
    #allocation12 [shape = 'u8[196608]{0}', space=vmem, size = 0x30000, scoped, tag = 'input window, operand 5, single buffered']
    #allocation13 [shape = 'u8[4096]{0}', space=vmem, size = 0x1000, scoped, tag = 'output window, operand 0, single buffered']
    %20 = vsyncpa [#allocation8], 0
    %21 = vsyncpa [#allocation11], 0
    %22 = vsyncpa [#allocation9], 0
    // Predicated region
    $region2: #{tpu_custom_call.1} parent=1 // pred_check
      _
    $region3: #{tpu_custom_call.1} parent=1 // pred_check_branch
      %24 = sbr.rel (0) target = $region5
    $region4: #{tpu_custom_call.1} parent=1 // pred_region
      %s26 = ssub.s32 384, 384
      %27 = vsyncadd [#allocation8], %s26
      %s29 = sshll.u32 [#allocation7], 4
      %s30 = int_to_ptr.vmem [resolvable:$true] %s29
      %32 = dma.hbm_to_vmem [thread:$0]  %s3, 384, %s30, [#allocation8]
    $region5: #{tpu_custom_call.1} parent=1 // pred_fallthru
      _
    // Predicated region
    $region6: #{tpu_custom_call.1} parent=1 // pred_check
      _
    $region7: #{tpu_custom_call.1} parent=1 // pred_check_branch
      %34 = sbr.rel (0) target = $region9
    $region8: #{tpu_custom_call.1} parent=1 // pred_region
      %s36 = ssub.s32 6144, 6144
      %37 = vsyncadd [#allocation11], %s36
      %s38 = sshll.u32 [#allocation10], 4
      %s39 = int_to_ptr.vmem [resolvable:$true] %s38
      %44 = dma.hbm_to_vmem [thread:$0]  %s4, 6144, %s39, [#allocation11], 64, 64, 4
    $region9: #{tpu_custom_call.1} parent=1 // pred_fallthru
      _
    // Predicated region
    $region10: #{tpu_custom_call.1} parent=1 // pred_check
      _
    $region11: #{tpu_custom_call.1} parent=1 // pred_check_branch
      %46 = sbr.rel (0) target = $region13
    $region12: #{tpu_custom_call.1} parent=1 // pred_region
      %s48 = ssub.s32 6144, 6144
      %49 = vsyncadd [#allocation11], %s48
      %s50 = sshll.u32 [#allocation12], 4
      %s51 = int_to_ptr.vmem [resolvable:$true] %s50
      %56 = dma.hbm_to_vmem [thread:$0]  %s5, 6144, %s51, [#allocation11], 64, 64, 4
    $region13: #{tpu_custom_call.1} parent=1 // pred_fallthru
      _
    // Predicated region
    $region14: #{tpu_custom_call.1} parent=1 // pred_check
      _
    $region15: #{tpu_custom_call.1} parent=1 // pred_check_branch
      %58 = sbr.rel (0) target = $region17
    $region16: #{tpu_custom_call.1} parent=1 // pred_region
      _
    $region17: #{tpu_custom_call.1} parent=1 // pred_fallthru
      _
    // Predicated region
    $region18: #{tpu_custom_call.1} parent=1 // pred_check
      _
    $region19: #{tpu_custom_call.1} parent=1 // pred_check_branch
      %60 = sbr.rel (0) target = $region21
    $region20: #{tpu_custom_call.1} parent=1 // pred_region
      %61 = dma.done [#allocation8], 384
    $region21: #{tpu_custom_call.1} parent=1 // pred_fallthru
      _
    // Predicated region
    $region22: #{tpu_custom_call.1} parent=1 // pred_check
      _
    $region23: #{tpu_custom_call.1} parent=1 // pred_check_branch
      %63 = sbr.rel (0) target = $region25
    $region24: #{tpu_custom_call.1} parent=1 // pred_region
      %64 = dma.done [#allocation11], 6144
    $region25: #{tpu_custom_call.1} parent=1 // pred_fallthru
      _
    // Predicated region
    $region26: #{tpu_custom_call.1} parent=1 // pred_check
      _
    $region27: #{tpu_custom_call.1} parent=1 // pred_check_branch
      %66 = sbr.rel (0) target = $region29
    $region28: #{tpu_custom_call.1} parent=1 // pred_region
      %67 = dma.done [#allocation11], 6144
    $region29: #{tpu_custom_call.1} parent=1 // pred_fallthru
      _
    %s69 = smul.u32 0, 8
    %s70 = ssub.s32 2, %s69
    %p71 = scmp.lt.s32.totalorder %s70, 8
    %s72 = scalar_select %p71, %s70, 8
    // While loop
    $region30: #{tpu_custom_call.1} parent=1 // loop_pre_header
      _
    $region31: #{tpu_custom_call.1} parent=1 // loop_header
      %s74 = sphi 0, %s76
      %p75 = scmp.ge.s32.totalorder %s74, %s72
    $region32: #{tpu_custom_call.1} parent=1 // loop_header_branch
      %78 = sbr.rel (%p75) target = $region36
    $region33: #{tpu_custom_call.1} parent=1 // loop_body
      %s79 = sadd.s32 %s69, %s74
      %s80 = sld [smem:[#allocation5 + %s79]]
      %s81 = sshrl.u32 %s80, 3
      %s82 = sand.u32 %s80, 7
      %s83 = smul.u32 %s81, 48
      %s84 = sadd.s32 %s82, %s83
      %s85 = smul.u32 %s79, 48
      %s86 = sadd.s32 %s84, %s85
      %s87 = smul.addr %s86, 16
      %s88 = scalar_lea.hbm %s2, %s87
      %s89 = sshrl.u32 %s74, 3
      %s90 = sand.u32 %s74, 7
      %s91 = smul.u32 %s89, 48
      %s92 = sadd.s32 %s90, %s91
      %s93 = scalar_lea.vmem [#allocation2], %s92
      %s94 = scalar_lea.sflag [#allocation3], %s74
      %s96 = sshll.u32 %s93, 4
      %s97 = int_to_ptr.vmem [resolvable:$true] %s96
      %99 = dma.hbm_to_vmem [thread:$0]  %s88, 96, %s97, %s94, 128, 128, 1
      %s100 = sld [smem:[#allocation6 + %s79]]
      %s101 = sshrl.u32 %s100, 3
      %s102 = sand.u32 %s100, 7
      %s103 = smul.u32 %s101, 48
      %s104 = sadd.s32 %s102, %s103
      %s105 = sadd.s32 %s104, %s85
      %s106 = smul.addr %s105, 16
      %s107 = scalar_lea.hbm %s2, %s106
      %s108 = sadd.s32 %s92, 48
      %s109 = scalar_lea.vmem [#allocation2], %s108
      %s110 = sadd.s32 %s74, 8
      %s111 = scalar_lea.sflag [#allocation3], %s110
      %s113 = sshll.u32 %s109, 4
      %s114 = int_to_ptr.vmem [resolvable:$true] %s113
      %116 = dma.hbm_to_vmem [thread:$0]  %s107, 96, %s114, %s111, 128, 128, 1
    $region34: #{tpu_custom_call.1} parent=1 // loop_footer
      %s76 = sadd.s32 %s74, 1
    $region35: #{tpu_custom_call.1} parent=1 // loop_footer_branch
      %73 = sbr.rel target = $region31
    $region36: #{tpu_custom_call.1} parent=1 // loop_exit
      _
    %v117 = vld [vmem:[#allocation7] sm:$0xff]
    %v118 = vld [vmem:[#allocation7 + $0x8] sm:$0xff]
    %v119 = vld [vmem:[#allocation7 + $0x10] sm:$0xff]
    %v120 = vld [vmem:[#allocation12] sm:$0xf]
    %v121 = vld [vmem:[#allocation12 + $0x4] sm:$0xf]
    %v122 = vld [vmem:[#allocation12 + $0x8] sm:$0xf]
    %v123 = vld [vmem:[#allocation12 + $0xc] sm:$0xf]
    %v124 = vld [vmem:[#allocation12 + $0x10] sm:$0xf]
    %v125 = vld [vmem:[#allocation12 + $0x14] sm:$0xf]
    %v126 = vld [vmem:[#allocation12 + $0x18] sm:$0xf]
    %v127 = vld [vmem:[#allocation12 + $0x1c] sm:$0xf]
    %v128 = vld [vmem:[#allocation12 + $0x20] sm:$0xf]
    %v129 = vld [vmem:[#allocation12 + $0x24] sm:$0xf]
    %v130 = vld [vmem:[#allocation12 + $0x28] sm:$0xf]
    %v131 = vld [vmem:[#allocation12 + $0x2c] sm:$0xf]
    %v132 = vld [vmem:[#allocation12 + $0x30] sm:$0xf]
    %v133 = vld [vmem:[#allocation12 + $0x34] sm:$0xf]
    %v134 = vld [vmem:[#allocation12 + $0x38] sm:$0xf]
    %v135 = vld [vmem:[#allocation12 + $0x3c] sm:$0xf]
    %v136 = vld [vmem:[#allocation12 + $0x40] sm:$0xf]
    %v137 = vld [vmem:[#allocation12 + $0x44] sm:$0xf]
    %v138 = vld [vmem:[#allocation12 + $0x48] sm:$0xf]
    %v139 = vld [vmem:[#allocation12 + $0x4c] sm:$0xf]
    %v140 = vld [vmem:[#allocation12 + $0x50] sm:$0xf]
    %v141 = vld [vmem:[#allocation12 + $0x54] sm:$0xf]
    %v142 = vld [vmem:[#allocation12 + $0x58] sm:$0xf]
    %v143 = vld [vmem:[#allocation12 + $0x5c] sm:$0xf]
    %v144 = vld [vmem:[#allocation12 + $0x60] sm:$0xf]
    %v145 = vld [vmem:[#allocation12 + $0x64] sm:$0xf]
    %v146 = vld [vmem:[#allocation12 + $0x68] sm:$0xf]
    %v147 = vld [vmem:[#allocation12 + $0x6c] sm:$0xf]
    %v148 = vld [vmem:[#allocation12 + $0x70] sm:$0xf]
    %v149 = vld [vmem:[#allocation12 + $0x74] sm:$0xf]
    %v150 = vld [vmem:[#allocation12 + $0x78] sm:$0xf]
    %v151 = vld [vmem:[#allocation12 + $0x7c] sm:$0xf]
    %v152 = vld [vmem:[#allocation12 + $0x80] sm:$0xf]
    %v153 = vld [vmem:[#allocation12 + $0x84] sm:$0xf]
    %v154 = vld [vmem:[#allocation12 + $0x88] sm:$0xf]
    %v155 = vld [vmem:[#allocation12 + $0x8c] sm:$0xf]
    %v156 = vld [vmem:[#allocation12 + $0x90] sm:$0xf]
    %v157 = vld [vmem:[#allocation12 + $0x94] sm:$0xf]
    %v158 = vld [vmem:[#allocation12 + $0x98] sm:$0xf]
    %v159 = vld [vmem:[#allocation12 + $0x9c] sm:$0xf]
    %v160 = vld [vmem:[#allocation12 + $0xa0] sm:$0xf]
    %v161 = vld [vmem:[#allocation12 + $0xa4] sm:$0xf]
    %v162 = vld [vmem:[#allocation12 + $0xa8] sm:$0xf]
    %v163 = vld [vmem:[#allocation12 + $0xac] sm:$0xf]
    %v164 = vld [vmem:[#allocation12 + $0xb0] sm:$0xf]
    %v165 = vld [vmem:[#allocation12 + $0xb4] sm:$0xf]
    %v166 = vld [vmem:[#allocation12 + $0xb8] sm:$0xf]
    %v167 = vld [vmem:[#allocation12 + $0xbc] sm:$0xf]
    %v168 = vld [vmem:[#allocation12 + $0xc0] sm:$0xf]
    %v169 = vld [vmem:[#allocation12 + $0xc4] sm:$0xf]
    %v170 = vld [vmem:[#allocation12 + $0xc8] sm:$0xf]
    %v171 = vld [vmem:[#allocation12 + $0xcc] sm:$0xf]
    %v172 = vld [vmem:[#allocation12 + $0xd0] sm:$0xf]
    %v173 = vld [vmem:[#allocation12 + $0xd4] sm:$0xf]
    %v174 = vld [vmem:[#allocation12 + $0xd8] sm:$0xf]
    %v175 = vld [vmem:[#allocation12 + $0xdc] sm:$0xf]
    %v176 = vld [vmem:[#allocation12 + $0xe0] sm:$0xf]
    %v177 = vld [vmem:[#allocation12 + $0xe4] sm:$0xf]
    %v178 = vld [vmem:[#allocation12 + $0xe8] sm:$0xf]
    %v179 = vld [vmem:[#allocation12 + $0xec] sm:$0xf]
    %v180 = vld [vmem:[#allocation12 + $0xf0] sm:$0xf]
    %v181 = vld [vmem:[#allocation12 + $0xf4] sm:$0xf]
    %v182 = vld [vmem:[#allocation12 + $0xf8] sm:$0xf]
    %v183 = vld [vmem:[#allocation12 + $0xfc] sm:$0xf]
    %v184 = vld [vmem:[#allocation12 + $0x100] sm:$0xf]
    %v185 = vld [vmem:[#allocation12 + $0x104] sm:$0xf]
    %v186 = vld [vmem:[#allocation12 + $0x108] sm:$0xf]
    %v187 = vld [vmem:[#allocation12 + $0x10c] sm:$0xf]
    %v188 = vld [vmem:[#allocation12 + $0x110] sm:$0xf]
    %v189 = vld [vmem:[#allocation12 + $0x114] sm:$0xf]
    %v190 = vld [vmem:[#allocation12 + $0x118] sm:$0xf]
    %v191 = vld [vmem:[#allocation12 + $0x11c] sm:$0xf]
    %v192 = vld [vmem:[#allocation12 + $0x120] sm:$0xf]
    %v193 = vld [vmem:[#allocation12 + $0x124] sm:$0xf]
    %v194 = vld [vmem:[#allocation12 + $0x128] sm:$0xf]
    %v195 = vld [vmem:[#allocation12 + $0x12c] sm:$0xf]
    %v196 = vld [vmem:[#allocation12 + $0x130] sm:$0xf]
    %v197 = vld [vmem:[#allocation12 + $0x134] sm:$0xf]
    %v198 = vld [vmem:[#allocation12 + $0x138] sm:$0xf]
    %v199 = vld [vmem:[#allocation12 + $0x13c] sm:$0xf]
    %v200 = vld [vmem:[#allocation12 + $0x140] sm:$0xf]
    %v201 = vld [vmem:[#allocation12 + $0x144] sm:$0xf]
    %v202 = vld [vmem:[#allocation12 + $0x148] sm:$0xf]
    %v203 = vld [vmem:[#allocation12 + $0x14c] sm:$0xf]
    %v204 = vld [vmem:[#allocation12 + $0x150] sm:$0xf]
    %v205 = vld [vmem:[#allocation12 + $0x154] sm:$0xf]
    %v206 = vld [vmem:[#allocation12 + $0x158] sm:$0xf]
    %v207 = vld [vmem:[#allocation12 + $0x15c] sm:$0xf]
    %v208 = vld [vmem:[#allocation12 + $0x160] sm:$0xf]
    %v209 = vld [vmem:[#allocation12 + $0x164] sm:$0xf]
    %v210 = vld [vmem:[#allocation12 + $0x168] sm:$0xf]
    %v211 = vld [vmem:[#allocation12 + $0x16c] sm:$0xf]
    %v212 = vld [vmem:[#allocation12 + $0x170] sm:$0xf]
    %v213 = vld [vmem:[#allocation12 + $0x174] sm:$0xf]
    %v214 = vld [vmem:[#allocation12 + $0x178] sm:$0xf]
    %v215 = vld [vmem:[#allocation12 + $0x17c] sm:$0xf]
    %v216 = vld [vmem:[%s6] sm:$0x1]
    %v218 = vlaneseq
    %v219 = vshrl.u32 %v218, 7
    %v220 = vsub.s32 0, %v219
    %v221 = vrot.slane %v216, %v220
    %v226 = vunpack.c.l.b16 %v117
    %v227 = vunpack.c.h.b16 %v117
    %v228 = vunpack.c.l.b16 %v118
    %v229 = vunpack.c.h.b16 %v118
    %v230 = vunpack.c.l.b16 %v119
    %v231 = vunpack.c.h.b16 %v119
    %v232 = vpack.c.b16 %v226, %v226
    %v233 = vpack.c.b16 %v227, %v227
    %v234 = vpack.c.b16 %v228, %v228
    %v235 = vpack.c.b16 %v229, %v229
    %v236 = vpack.c.b16 %v230, %v230
    %v237 = vpack.c.b16 %v231, %v231
    %v340 = vunpack.c.l.b16 %v120
    %v341 = vunpack.c.l.b16 %v121
    %v342 = vunpack.c.l.b16 %v122
    %v343 = vunpack.c.l.b16 %v123
    %v344 = vunpack.c.l.b16 %v124
    %v345 = vunpack.c.l.b16 %v125
    %v346 = vunpack.c.l.b16 %v126
    %v347 = vunpack.c.l.b16 %v127
    %v348 = vunpack.c.l.b16 %v128
    %v349 = vunpack.c.l.b16 %v129
    %v350 = vunpack.c.l.b16 %v130
    %v351 = vunpack.c.l.b16 %v131
    %v352 = vunpack.c.l.b16 %v132
    %v353 = vunpack.c.l.b16 %v133
    %v354 = vunpack.c.l.b16 %v134
    %v355 = vunpack.c.l.b16 %v135
    %v356 = vunpack.c.l.b16 %v136
    %v357 = vunpack.c.l.b16 %v137
    %v358 = vunpack.c.l.b16 %v138
    %v359 = vunpack.c.l.b16 %v139
    %v360 = vunpack.c.l.b16 %v140
    %v361 = vunpack.c.l.b16 %v141
    %v362 = vunpack.c.l.b16 %v142
    %v363 = vunpack.c.l.b16 %v143
    %v364 = vunpack.c.l.b16 %v144
    %v365 = vunpack.c.l.b16 %v145
    %v366 = vunpack.c.l.b16 %v146
    %v367 = vunpack.c.l.b16 %v147
    %v368 = vunpack.c.l.b16 %v148
    %v369 = vunpack.c.l.b16 %v149
    %v370 = vunpack.c.l.b16 %v150
    %v371 = vunpack.c.l.b16 %v151
    %v372 = vunpack.c.l.b16 %v152
    %v373 = vunpack.c.l.b16 %v153
    %v374 = vunpack.c.l.b16 %v154
    %v375 = vunpack.c.l.b16 %v155
    %v376 = vunpack.c.l.b16 %v156
    %v377 = vunpack.c.l.b16 %v157
    %v378 = vunpack.c.l.b16 %v158
    %v379 = vunpack.c.l.b16 %v159
    %v380 = vunpack.c.l.b16 %v160
    %v381 = vunpack.c.l.b16 %v161
    %v382 = vunpack.c.l.b16 %v162
    %v383 = vunpack.c.l.b16 %v163
    %v384 = vunpack.c.l.b16 %v164
    %v385 = vunpack.c.l.b16 %v165
    %v386 = vunpack.c.l.b16 %v166
    %v387 = vunpack.c.l.b16 %v167
    %v388 = vunpack.c.l.b16 %v168
    %v389 = vunpack.c.l.b16 %v169
    %v390 = vunpack.c.l.b16 %v170
    %v391 = vunpack.c.l.b16 %v171
    %v392 = vunpack.c.l.b16 %v172
    %v393 = vunpack.c.l.b16 %v173
    %v394 = vunpack.c.l.b16 %v174
    %v395 = vunpack.c.l.b16 %v175
    %v396 = vunpack.c.l.b16 %v176
    %v397 = vunpack.c.l.b16 %v177
    %v398 = vunpack.c.l.b16 %v178
    %v399 = vunpack.c.l.b16 %v179
    %v400 = vunpack.c.l.b16 %v180
    %v401 = vunpack.c.l.b16 %v181
    %v402 = vunpack.c.l.b16 %v182
    %v403 = vunpack.c.l.b16 %v183
    %v404 = vunpack.c.l.b16 %v184
    %v405 = vunpack.c.l.b16 %v185
    %v406 = vunpack.c.l.b16 %v186
    %v407 = vunpack.c.l.b16 %v187
    %v408 = vunpack.c.l.b16 %v188
    %v409 = vunpack.c.l.b16 %v189
    %v410 = vunpack.c.l.b16 %v190
    %v411 = vunpack.c.l.b16 %v191
    %v412 = vunpack.c.l.b16 %v192
    %v413 = vunpack.c.l.b16 %v193
    %v414 = vunpack.c.l.b16 %v194
    %v415 = vunpack.c.l.b16 %v195
    %v416 = vunpack.c.l.b16 %v196
    %v417 = vunpack.c.l.b16 %v197
    %v418 = vunpack.c.l.b16 %v198
    %v419 = vunpack.c.l.b16 %v199
    %v420 = vunpack.c.l.b16 %v200
    %v421 = vunpack.c.l.b16 %v201
    %v422 = vunpack.c.l.b16 %v202
    %v423 = vunpack.c.l.b16 %v203
    %v424 = vunpack.c.l.b16 %v204
    %v425 = vunpack.c.l.b16 %v205
    %v426 = vunpack.c.l.b16 %v206
    %v427 = vunpack.c.l.b16 %v207
    %v428 = vunpack.c.l.b16 %v208
    %v429 = vunpack.c.l.b16 %v209
    %v430 = vunpack.c.l.b16 %v210
    %v431 = vunpack.c.l.b16 %v211
    %v432 = vunpack.c.l.b16 %v212
    %v433 = vunpack.c.l.b16 %v213
    %v434 = vunpack.c.l.b16 %v214
    %v435 = vunpack.c.l.b16 %v215
    %v436 = vpack.c.b16 %v341, %v340
    %v437 = vpack.c.b16 %v343, %v342
    %v438 = vpack.c.b16 %v345, %v344
    %v439 = vpack.c.b16 %v347, %v346
    %v440 = vpack.c.b16 %v349, %v348
    %v441 = vpack.c.b16 %v351, %v350
    %v442 = vpack.c.b16 %v353, %v352
    %v443 = vpack.c.b16 %v355, %v354
    %v444 = vpack.c.b16 %v357, %v356
    %v445 = vpack.c.b16 %v359, %v358
    %v446 = vpack.c.b16 %v361, %v360
    %v447 = vpack.c.b16 %v363, %v362
    %v448 = vpack.c.b16 %v365, %v364
    %v449 = vpack.c.b16 %v367, %v366
    %v450 = vpack.c.b16 %v369, %v368
    %v451 = vpack.c.b16 %v371, %v370
    %v452 = vpack.c.b16 %v373, %v372
    %v453 = vpack.c.b16 %v375, %v374
    %v454 = vpack.c.b16 %v377, %v376
    %v455 = vpack.c.b16 %v379, %v378
    %v456 = vpack.c.b16 %v381, %v380
    %v457 = vpack.c.b16 %v383, %v382
    %v458 = vpack.c.b16 %v385, %v384
    %v459 = vpack.c.b16 %v387, %v386
    %v460 = vpack.c.b16 %v389, %v388
    %v461 = vpack.c.b16 %v391, %v390
    %v462 = vpack.c.b16 %v393, %v392
    %v463 = vpack.c.b16 %v395, %v394
    %v464 = vpack.c.b16 %v397, %v396
    %v465 = vpack.c.b16 %v399, %v398
    %v466 = vpack.c.b16 %v401, %v400
    %v467 = vpack.c.b16 %v403, %v402
    %v468 = vpack.c.b16 %v405, %v404
    %v469 = vpack.c.b16 %v407, %v406
    %v470 = vpack.c.b16 %v409, %v408
    %v471 = vpack.c.b16 %v411, %v410
    %v472 = vpack.c.b16 %v413, %v412
    %v473 = vpack.c.b16 %v415, %v414
    %v474 = vpack.c.b16 %v417, %v416
    %v475 = vpack.c.b16 %v419, %v418
    %v476 = vpack.c.b16 %v421, %v420
    %v477 = vpack.c.b16 %v423, %v422
    %v478 = vpack.c.b16 %v425, %v424
    %v479 = vpack.c.b16 %v427, %v426
    %v480 = vpack.c.b16 %v429, %v428
    %v481 = vpack.c.b16 %v431, %v430
    %v482 = vpack.c.b16 %v433, %v432
    %v483 = vpack.c.b16 %v435, %v434
    %532 = vmatprep.subr.bf16.mxu0 0
    %533 = vmatpush1.bf16.msra.mxu0 %v443
    %534 = vmatprep.subr.bf16.mxu0 0
    %535 = vmatpush1.bf16.msra.mxu0 %v442
    %536 = vmatprep.subr.bf16.mxu0 0
    %537 = vmatpush1.bf16.msra.mxu0 %v441
    %538 = vmatprep.subr.bf16.mxu0 0
    %539 = vmatpush1.bf16.msra.mxu0 %v440
    %540 = vmatprep.subr.bf16.mxu0 0
    %541 = vmatpush1.bf16.msra.mxu0 %v439
    %542 = vmatprep.subr.bf16.mxu0 0
    %543 = vmatpush1.bf16.msra.mxu0 %v438
    %544 = vmatprep.subr.bf16.mxu0 0
    %545 = vmatpush1.bf16.msra.mxu0 %v437
    %546 = vmatprep.subr.bf16.mxu0 0
    %547 = vmatpush1.bf16.msra.mxu0 %v436
    %548 = vmatprep.subr.bf16.mxu0 0
    %549 = vmatpush2.bf16.msra.mxu0 %v451
    %550 = vmatprep.subr.bf16.mxu0 0
    %551 = vmatpush2.bf16.msra.mxu0 %v450
    %552 = vmatprep.subr.bf16.mxu0 0
    %553 = vmatpush2.bf16.msra.mxu0 %v449
    %554 = vmatprep.subr.bf16.mxu0 0
    %555 = vmatpush2.bf16.msra.mxu0 %v448
    %556 = vmatprep.subr.bf16.mxu0 0
    %557 = vmatpush2.bf16.msra.mxu0 %v447
    %558 = vmatprep.subr.bf16.mxu0 0
    %559 = vmatpush2.bf16.msra.mxu0 %v446
    %560 = vmatprep.subr.bf16.mxu0 0
    %561 = vmatpush2.bf16.msra.mxu0 %v445
    %562 = vmatprep.subr.bf16.mxu0 0
    %563 = vmatpush2.bf16.msra.mxu0 %v444
    %564 = vmatprep.mubr.bf16.mxu0 %v233
    %565 = vmatmul.mubr.bf16.gmra.mxu0 %v232
    %v566 = vpop.f32.mrf.mxu0
    %v567 = vadd.f32 %v221, %v566
    %v568 = vpop.f32.mrf.mxu0
    %v569 = vpop.f32.mrf.mxu0
    %v570 = vpop.f32.mrf.mxu0
    %571 = vdwg.mxu0
    %572 = vmatprep.subr.bf16.mxu0 0
    %573 = vmatpush1.bf16.msra.mxu0 %v459
    %574 = vmatprep.subr.bf16.mxu0 0
    %575 = vmatpush1.bf16.msra.mxu0 %v458
    %576 = vmatprep.subr.bf16.mxu0 0
    %577 = vmatpush1.bf16.msra.mxu0 %v457
    %578 = vmatprep.subr.bf16.mxu0 0
    %579 = vmatpush1.bf16.msra.mxu0 %v456
    %580 = vmatprep.subr.bf16.mxu0 0
    %581 = vmatpush1.bf16.msra.mxu0 %v455
    %582 = vmatprep.subr.bf16.mxu0 0
    %583 = vmatpush1.bf16.msra.mxu0 %v454
    %584 = vmatprep.subr.bf16.mxu0 0
    %585 = vmatpush1.bf16.msra.mxu0 %v453
    %586 = vmatprep.subr.bf16.mxu0 0
    %587 = vmatpush1.bf16.msra.mxu0 %v452
    %588 = vmatprep.subr.bf16.mxu0 0
    %589 = vmatpush2.bf16.msra.mxu0 %v467
    %590 = vmatprep.subr.bf16.mxu0 0
    %591 = vmatpush2.bf16.msra.mxu0 %v466
    %592 = vmatprep.subr.bf16.mxu0 0
    %593 = vmatpush2.bf16.msra.mxu0 %v465
    %594 = vmatprep.subr.bf16.mxu0 0
    %595 = vmatpush2.bf16.msra.mxu0 %v464
    %596 = vmatprep.subr.bf16.mxu0 0
    %597 = vmatpush2.bf16.msra.mxu0 %v463
    %598 = vmatprep.subr.bf16.mxu0 0
    %599 = vmatpush2.bf16.msra.mxu0 %v462
    %600 = vmatprep.subr.bf16.mxu0 0
    %601 = vmatpush2.bf16.msra.mxu0 %v461
    %602 = vmatprep.subr.bf16.mxu0 0
    %603 = vmatpush2.bf16.msra.mxu0 %v460
    %604 = vmatprep.mubr.bf16.mxu0 %v235
    %605 = vmatmul.mubr.bf16.gmra.mxu0 %v234
    %v606 = vpop.f32.mrf.mxu0
    %v607 = vadd.f32 %v567, %v606
    %v608 = vpop.f32.mrf.mxu0
    %v609 = vpop.f32.mrf.mxu0
    %v610 = vpop.f32.mrf.mxu0
    %611 = vdwg.mxu0
    %612 = vmatprep.subr.bf16.mxu0 0
    %613 = vmatpush1.bf16.msra.mxu0 %v475
    %614 = vmatprep.subr.bf16.mxu0 0
    %615 = vmatpush1.bf16.msra.mxu0 %v474
    %616 = vmatprep.subr.bf16.mxu0 0
    %617 = vmatpush1.bf16.msra.mxu0 %v473
    %618 = vmatprep.subr.bf16.mxu0 0
    %619 = vmatpush1.bf16.msra.mxu0 %v472
    %620 = vmatprep.subr.bf16.mxu0 0
    %621 = vmatpush1.bf16.msra.mxu0 %v471
    %622 = vmatprep.subr.bf16.mxu0 0
    %623 = vmatpush1.bf16.msra.mxu0 %v470
    %624 = vmatprep.subr.bf16.mxu0 0
    %625 = vmatpush1.bf16.msra.mxu0 %v469
    %626 = vmatprep.subr.bf16.mxu0 0
    %627 = vmatpush1.bf16.msra.mxu0 %v468
    %628 = vmatprep.subr.bf16.mxu0 0
    %629 = vmatpush2.bf16.msra.mxu0 %v483
    %630 = vmatprep.subr.bf16.mxu0 0
    %631 = vmatpush2.bf16.msra.mxu0 %v482
    %632 = vmatprep.subr.bf16.mxu0 0
    %633 = vmatpush2.bf16.msra.mxu0 %v481
    %634 = vmatprep.subr.bf16.mxu0 0
    %635 = vmatpush2.bf16.msra.mxu0 %v480
    %636 = vmatprep.subr.bf16.mxu0 0
    %637 = vmatpush2.bf16.msra.mxu0 %v479
    %638 = vmatprep.subr.bf16.mxu0 0
    %639 = vmatpush2.bf16.msra.mxu0 %v478
    %640 = vmatprep.subr.bf16.mxu0 0
    %641 = vmatpush2.bf16.msra.mxu0 %v477
    %642 = vmatprep.subr.bf16.mxu0 0
    %643 = vmatpush2.bf16.msra.mxu0 %v476
    %644 = vmatprep.mubr.bf16.mxu0 %v237
    %645 = vmatmul.mubr.bf16.gmra.mxu0 %v236
    %v646 = vpop.f32.mrf.mxu0
    %v647 = vadd.f32 %v607, %v646
    %v648 = vpop.f32.mrf.mxu0
    %v649 = vpop.f32.mrf.mxu0
    %v650 = vpop.f32.mrf.mxu0
    %651 = vdwg.mxu0
    // While loop
    $region37: #{tpu_custom_call.1} parent=1 // loop_pre_header
      _
    $region38: #{tpu_custom_call.1} parent=1 // loop_header
      %s653 = sphi 0, %s655
      %p654 = scmp.ge.s32.totalorder %s653, %s72
    $region39: #{tpu_custom_call.1} parent=1 // loop_header_branch
      %657 = sbr.rel (%p654) target = $region43
    $region40: #{tpu_custom_call.1} parent=1 // loop_body
      %s658 = scalar_lea.sflag [#allocation3], %s653
      %s659 = smul.u32 1, 6
      %s660 = sshll.u32 %s659, 4
      %661 = dma.done %s658, %s660
      %s662 = sadd.s32 %s653, 8
      %s663 = scalar_lea.sflag [#allocation3], %s662
      %s664 = sshll.u32 %s659, 4
      %665 = dma.done %s663, %s664
    $region41: #{tpu_custom_call.1} parent=1 // loop_footer
      %s655 = sadd.s32 %s653, 1
    $region42: #{tpu_custom_call.1} parent=1 // loop_footer_branch
      %652 = sbr.rel target = $region38
    $region43: #{tpu_custom_call.1} parent=1 // loop_exit
      _
    %v666 = vld [vmem:[#allocation2] sm:$0xff]
    %v667 = vld [vmem:[#allocation2 + $0x8] sm:$0xff]
    %v668 = vld [vmem:[#allocation2 + $0x10] sm:$0xff]
    %v669 = vld [vmem:[#allocation2 + $0x18] sm:$0xff]
    %v670 = vld [vmem:[#allocation2 + $0x20] sm:$0xff]
    %v671 = vld [vmem:[#allocation2 + $0x28] sm:$0xff]
    %s672 = scalar_lea.vmem [#allocation2], 48
    %v673 = vld [vmem:[%s672] sm:$0xff]
    %v674 = vld [vmem:[%s672 + $0x8] sm:$0xff]
    %v675 = vld [vmem:[%s672 + $0x10] sm:$0xff]
    %v676 = vld [vmem:[%s672 + $0x18] sm:$0xff]
    %v677 = vld [vmem:[%s672 + $0x20] sm:$0xff]
    %v678 = vld [vmem:[%s672 + $0x28] sm:$0xff]
    %v679 = vadd.f32 %v666, %v673
    %v680 = vadd.f32 %v667, %v674
    %v681 = vadd.f32 %v668, %v675
    %v682 = vadd.f32 %v669, %v676
    %v683 = vadd.f32 %v670, %v677
    %v684 = vadd.f32 %v671, %v678
    %v685 = vmul.f32 %v679, 0.5
    %v686 = vmul.f32 %v680, 0.5
    %v687 = vmul.f32 %v681, 0.5
    %v688 = vmul.f32 %v682, 0.5
    %v689 = vmul.f32 %v683, 0.5
    %v690 = vmul.f32 %v684, 0.5
    %v691 = vpack.c.bf16 %v685, %v685
    %v692 = vpack.c.bf16 %v686, %v686
    %v693 = vpack.c.bf16 %v687, %v687
    %v694 = vpack.c.bf16 %v688, %v688
    %v695 = vpack.c.bf16 %v689, %v689
    %v696 = vpack.c.bf16 %v690, %v690
    %v697 = vld [vmem:[#allocation10] sm:$0xf]
    %v698 = vld [vmem:[#allocation10 + $0x4] sm:$0xf]
    %v699 = vld [vmem:[#allocation10 + $0x8] sm:$0xf]
    %v700 = vld [vmem:[#allocation10 + $0xc] sm:$0xf]
    %v701 = vld [vmem:[#allocation10 + $0x10] sm:$0xf]
    %v702 = vld [vmem:[#allocation10 + $0x14] sm:$0xf]
    %v703 = vld [vmem:[#allocation10 + $0x18] sm:$0xf]
    %v704 = vld [vmem:[#allocation10 + $0x1c] sm:$0xf]
    %v705 = vld [vmem:[#allocation10 + $0x20] sm:$0xf]
    %v706 = vld [vmem:[#allocation10 + $0x24] sm:$0xf]
    %v707 = vld [vmem:[#allocation10 + $0x28] sm:$0xf]
    %v708 = vld [vmem:[#allocation10 + $0x2c] sm:$0xf]
    %v709 = vld [vmem:[#allocation10 + $0x30] sm:$0xf]
    %v710 = vld [vmem:[#allocation10 + $0x34] sm:$0xf]
    %v711 = vld [vmem:[#allocation10 + $0x38] sm:$0xf]
    %v712 = vld [vmem:[#allocation10 + $0x3c] sm:$0xf]
    %v713 = vld [vmem:[#allocation10 + $0x40] sm:$0xf]
    %v714 = vld [vmem:[#allocation10 + $0x44] sm:$0xf]
    %v715 = vld [vmem:[#allocation10 + $0x48] sm:$0xf]
    %v716 = vld [vmem:[#allocation10 + $0x4c] sm:$0xf]
    %v717 = vld [vmem:[#allocation10 + $0x50] sm:$0xf]
    %v718 = vld [vmem:[#allocation10 + $0x54] sm:$0xf]
    %v719 = vld [vmem:[#allocation10 + $0x58] sm:$0xf]
    %v720 = vld [vmem:[#allocation10 + $0x5c] sm:$0xf]
    %v721 = vld [vmem:[#allocation10 + $0x60] sm:$0xf]
    %v722 = vld [vmem:[#allocation10 + $0x64] sm:$0xf]
    %v723 = vld [vmem:[#allocation10 + $0x68] sm:$0xf]
    %v724 = vld [vmem:[#allocation10 + $0x6c] sm:$0xf]
    %v725 = vld [vmem:[#allocation10 + $0x70] sm:$0xf]
    %v726 = vld [vmem:[#allocation10 + $0x74] sm:$0xf]
    %v727 = vld [vmem:[#allocation10 + $0x78] sm:$0xf]
    %v728 = vld [vmem:[#allocation10 + $0x7c] sm:$0xf]
    %v729 = vld [vmem:[#allocation10 + $0x80] sm:$0xf]
    %v730 = vld [vmem:[#allocation10 + $0x84] sm:$0xf]
    %v731 = vld [vmem:[#allocation10 + $0x88] sm:$0xf]
    %v732 = vld [vmem:[#allocation10 + $0x8c] sm:$0xf]
    %v733 = vld [vmem:[#allocation10 + $0x90] sm:$0xf]
    %v734 = vld [vmem:[#allocation10 + $0x94] sm:$0xf]
    %v735 = vld [vmem:[#allocation10 + $0x98] sm:$0xf]
    %v736 = vld [vmem:[#allocation10 + $0x9c] sm:$0xf]
    %v737 = vld [vmem:[#allocation10 + $0xa0] sm:$0xf]
    %v738 = vld [vmem:[#allocation10 + $0xa4] sm:$0xf]
    %v739 = vld [vmem:[#allocation10 + $0xa8] sm:$0xf]
    %v740 = vld [vmem:[#allocation10 + $0xac] sm:$0xf]
    %v741 = vld [vmem:[#allocation10 + $0xb0] sm:$0xf]
    %v742 = vld [vmem:[#allocation10 + $0xb4] sm:$0xf]
    %v743 = vld [vmem:[#allocation10 + $0xb8] sm:$0xf]
    %v744 = vld [vmem:[#allocation10 + $0xbc] sm:$0xf]
    %v745 = vld [vmem:[#allocation10 + $0xc0] sm:$0xf]
    %v746 = vld [vmem:[#allocation10 + $0xc4] sm:$0xf]
    %v747 = vld [vmem:[#allocation10 + $0xc8] sm:$0xf]
    %v748 = vld [vmem:[#allocation10 + $0xcc] sm:$0xf]
    %v749 = vld [vmem:[#allocation10 + $0xd0] sm:$0xf]
    %v750 = vld [vmem:[#allocation10 + $0xd4] sm:$0xf]
    %v751 = vld [vmem:[#allocation10 + $0xd8] sm:$0xf]
    %v752 = vld [vmem:[#allocation10 + $0xdc] sm:$0xf]
    %v753 = vld [vmem:[#allocation10 + $0xe0] sm:$0xf]
    %v754 = vld [vmem:[#allocation10 + $0xe4] sm:$0xf]
    %v755 = vld [vmem:[#allocation10 + $0xe8] sm:$0xf]
    %v756 = vld [vmem:[#allocation10 + $0xec] sm:$0xf]
    %v757 = vld [vmem:[#allocation10 + $0xf0] sm:$0xf]
    %v758 = vld [vmem:[#allocation10 + $0xf4] sm:$0xf]
    %v759 = vld [vmem:[#allocation10 + $0xf8] sm:$0xf]
    %v760 = vld [vmem:[#allocation10 + $0xfc] sm:$0xf]
    %v761 = vld [vmem:[#allocation10 + $0x100] sm:$0xf]
    %v762 = vld [vmem:[#allocation10 + $0x104] sm:$0xf]
    %v763 = vld [vmem:[#allocation10 + $0x108] sm:$0xf]
    %v764 = vld [vmem:[#allocation10 + $0x10c] sm:$0xf]
    %v765 = vld [vmem:[#allocation10 + $0x110] sm:$0xf]
    %v766 = vld [vmem:[#allocation10 + $0x114] sm:$0xf]
    %v767 = vld [vmem:[#allocation10 + $0x118] sm:$0xf]
    %v768 = vld [vmem:[#allocation10 + $0x11c] sm:$0xf]
    %v769 = vld [vmem:[#allocation10 + $0x120] sm:$0xf]
    %v770 = vld [vmem:[#allocation10 + $0x124] sm:$0xf]
    %v771 = vld [vmem:[#allocation10 + $0x128] sm:$0xf]
    %v772 = vld [vmem:[#allocation10 + $0x12c] sm:$0xf]
    %v773 = vld [vmem:[#allocation10 + $0x130] sm:$0xf]
    %v774 = vld [vmem:[#allocation10 + $0x134] sm:$0xf]
    %v775 = vld [vmem:[#allocation10 + $0x138] sm:$0xf]
    %v776 = vld [vmem:[#allocation10 + $0x13c] sm:$0xf]
    %v777 = vld [vmem:[#allocation10 + $0x140] sm:$0xf]
    %v778 = vld [vmem:[#allocation10 + $0x144] sm:$0xf]
    %v779 = vld [vmem:[#allocation10 + $0x148] sm:$0xf]
    %v780 = vld [vmem:[#allocation10 + $0x14c] sm:$0xf]
    %v781 = vld [vmem:[#allocation10 + $0x150] sm:$0xf]
    %v782 = vld [vmem:[#allocation10 + $0x154] sm:$0xf]
    %v783 = vld [vmem:[#allocation10 + $0x158] sm:$0xf]
    %v784 = vld [vmem:[#allocation10 + $0x15c] sm:$0xf]
    %v785 = vld [vmem:[#allocation10 + $0x160] sm:$0xf]
    %v786 = vld [vmem:[#allocation10 + $0x164] sm:$0xf]
    %v787 = vld [vmem:[#allocation10 + $0x168] sm:$0xf]
    %v788 = vld [vmem:[#allocation10 + $0x16c] sm:$0xf]
    %v789 = vld [vmem:[#allocation10 + $0x170] sm:$0xf]
    %v790 = vld [vmem:[#allocation10 + $0x174] sm:$0xf]
    %v791 = vld [vmem:[#allocation10 + $0x178] sm:$0xf]
    %v792 = vld [vmem:[#allocation10 + $0x17c] sm:$0xf]
    %v889 = vunpack.c.l.b16 %v697
    %v890 = vunpack.c.l.b16 %v698
    %v891 = vunpack.c.l.b16 %v699
    %v892 = vunpack.c.l.b16 %v700
    %v893 = vunpack.c.l.b16 %v701
    %v894 = vunpack.c.l.b16 %v702
    %v895 = vunpack.c.l.b16 %v703
    %v896 = vunpack.c.l.b16 %v704
    %v897 = vunpack.c.l.b16 %v705
    %v898 = vunpack.c.l.b16 %v706
    %v899 = vunpack.c.l.b16 %v707
    %v900 = vunpack.c.l.b16 %v708
    %v901 = vunpack.c.l.b16 %v709
    %v902 = vunpack.c.l.b16 %v710
    %v903 = vunpack.c.l.b16 %v711
    %v904 = vunpack.c.l.b16 %v712
    %v905 = vunpack.c.l.b16 %v713
    %v906 = vunpack.c.l.b16 %v714
    %v907 = vunpack.c.l.b16 %v715
    %v908 = vunpack.c.l.b16 %v716
    %v909 = vunpack.c.l.b16 %v717
    %v910 = vunpack.c.l.b16 %v718
    %v911 = vunpack.c.l.b16 %v719
    %v912 = vunpack.c.l.b16 %v720
    %v913 = vunpack.c.l.b16 %v721
    %v914 = vunpack.c.l.b16 %v722
    %v915 = vunpack.c.l.b16 %v723
    %v916 = vunpack.c.l.b16 %v724
    %v917 = vunpack.c.l.b16 %v725
    %v918 = vunpack.c.l.b16 %v726
    %v919 = vunpack.c.l.b16 %v727
    %v920 = vunpack.c.l.b16 %v728
    %v921 = vunpack.c.l.b16 %v729
    %v922 = vunpack.c.l.b16 %v730
    %v923 = vunpack.c.l.b16 %v731
    %v924 = vunpack.c.l.b16 %v732
    %v925 = vunpack.c.l.b16 %v733
    %v926 = vunpack.c.l.b16 %v734
    %v927 = vunpack.c.l.b16 %v735
    %v928 = vunpack.c.l.b16 %v736
    %v929 = vunpack.c.l.b16 %v737
    %v930 = vunpack.c.l.b16 %v738
    %v931 = vunpack.c.l.b16 %v739
    %v932 = vunpack.c.l.b16 %v740
    %v933 = vunpack.c.l.b16 %v741
    %v934 = vunpack.c.l.b16 %v742
    %v935 = vunpack.c.l.b16 %v743
    %v936 = vunpack.c.l.b16 %v744
    %v937 = vunpack.c.l.b16 %v745
    %v938 = vunpack.c.l.b16 %v746
    %v939 = vunpack.c.l.b16 %v747
    %v940 = vunpack.c.l.b16 %v748
    %v941 = vunpack.c.l.b16 %v749
    %v942 = vunpack.c.l.b16 %v750
    %v943 = vunpack.c.l.b16 %v751
    %v944 = vunpack.c.l.b16 %v752
    %v945 = vunpack.c.l.b16 %v753
    %v946 = vunpack.c.l.b16 %v754
    %v947 = vunpack.c.l.b16 %v755
    %v948 = vunpack.c.l.b16 %v756
    %v949 = vunpack.c.l.b16 %v757
    %v950 = vunpack.c.l.b16 %v758
    %v951 = vunpack.c.l.b16 %v759
    %v952 = vunpack.c.l.b16 %v760
    %v953 = vunpack.c.l.b16 %v761
    %v954 = vunpack.c.l.b16 %v762
    %v955 = vunpack.c.l.b16 %v763
    %v956 = vunpack.c.l.b16 %v764
    %v957 = vunpack.c.l.b16 %v765
    %v958 = vunpack.c.l.b16 %v766
    %v959 = vunpack.c.l.b16 %v767
    %v960 = vunpack.c.l.b16 %v768
    %v961 = vunpack.c.l.b16 %v769
    %v962 = vunpack.c.l.b16 %v770
    %v963 = vunpack.c.l.b16 %v771
    %v964 = vunpack.c.l.b16 %v772
    %v965 = vunpack.c.l.b16 %v773
    %v966 = vunpack.c.l.b16 %v774
    %v967 = vunpack.c.l.b16 %v775
    %v968 = vunpack.c.l.b16 %v776
    %v969 = vunpack.c.l.b16 %v777
    %v970 = vunpack.c.l.b16 %v778
    %v971 = vunpack.c.l.b16 %v779
    %v972 = vunpack.c.l.b16 %v780
    %v973 = vunpack.c.l.b16 %v781
    %v974 = vunpack.c.l.b16 %v782
    %v975 = vunpack.c.l.b16 %v783
    %v976 = vunpack.c.l.b16 %v784
    %v977 = vunpack.c.l.b16 %v785
    %v978 = vunpack.c.l.b16 %v786
    %v979 = vunpack.c.l.b16 %v787
    %v980 = vunpack.c.l.b16 %v788
    %v981 = vunpack.c.l.b16 %v789
    %v982 = vunpack.c.l.b16 %v790
    %v983 = vunpack.c.l.b16 %v791
    %v984 = vunpack.c.l.b16 %v792
    %v985 = vpack.c.b16 %v890, %v889
    %v986 = vpack.c.b16 %v892, %v891
    %v987 = vpack.c.b16 %v894, %v893
    %v988 = vpack.c.b16 %v896, %v895
    %v989 = vpack.c.b16 %v898, %v897
    %v990 = vpack.c.b16 %v900, %v899
    %v991 = vpack.c.b16 %v902, %v901
    %v992 = vpack.c.b16 %v904, %v903
    %v993 = vpack.c.b16 %v906, %v905
    %v994 = vpack.c.b16 %v908, %v907
    %v995 = vpack.c.b16 %v910, %v909
    %v996 = vpack.c.b16 %v912, %v911
    %v997 = vpack.c.b16 %v914, %v913
    %v998 = vpack.c.b16 %v916, %v915
    %v999 = vpack.c.b16 %v918, %v917
    %v1000 = vpack.c.b16 %v920, %v919
    %v1001 = vpack.c.b16 %v922, %v921
    %v1002 = vpack.c.b16 %v924, %v923
    %v1003 = vpack.c.b16 %v926, %v925
    %v1004 = vpack.c.b16 %v928, %v927
    %v1005 = vpack.c.b16 %v930, %v929
    %v1006 = vpack.c.b16 %v932, %v931
    %v1007 = vpack.c.b16 %v934, %v933
    %v1008 = vpack.c.b16 %v936, %v935
    %v1009 = vpack.c.b16 %v938, %v937
    %v1010 = vpack.c.b16 %v940, %v939
    %v1011 = vpack.c.b16 %v942, %v941
    %v1012 = vpack.c.b16 %v944, %v943
    %v1013 = vpack.c.b16 %v946, %v945
    %v1014 = vpack.c.b16 %v948, %v947
    %v1015 = vpack.c.b16 %v950, %v949
    %v1016 = vpack.c.b16 %v952, %v951
    %v1017 = vpack.c.b16 %v954, %v953
    %v1018 = vpack.c.b16 %v956, %v955
    %v1019 = vpack.c.b16 %v958, %v957
    %v1020 = vpack.c.b16 %v960, %v959
    %v1021 = vpack.c.b16 %v962, %v961
    %v1022 = vpack.c.b16 %v964, %v963
    %v1023 = vpack.c.b16 %v966, %v965
    %v1024 = vpack.c.b16 %v968, %v967
    %v1025 = vpack.c.b16 %v970, %v969
    %v1026 = vpack.c.b16 %v972, %v971
    %v1027 = vpack.c.b16 %v974, %v973
    %v1028 = vpack.c.b16 %v976, %v975
    %v1029 = vpack.c.b16 %v978, %v977
    %v1030 = vpack.c.b16 %v980, %v979
    %v1031 = vpack.c.b16 %v982, %v981
    %v1032 = vpack.c.b16 %v984, %v983
    %1081 = vmatprep.subr.bf16.mxu0 0
    %1082 = vmatpush1.bf16.msra.mxu0 %v992
    %1083 = vmatprep.subr.bf16.mxu0 0
    %1084 = vmatpush1.bf16.msra.mxu0 %v991
    %1085 = vmatprep.subr.bf16.mxu0 0
    %1086 = vmatpush1.bf16.msra.mxu0 %v990
    %1087 = vmatprep.subr.bf16.mxu0 0
    %1088 = vmatpush1.bf16.msra.mxu0 %v989
    %1089 = vmatprep.subr.bf16.mxu0 0
    %1090 = vmatpush1.bf16.msra.mxu0 %v988
    %1091 = vmatprep.subr.bf16.mxu0 0
    %1092 = vmatpush1.bf16.msra.mxu0 %v987
    %1093 = vmatprep.subr.bf16.mxu0 0
    %1094 = vmatpush1.bf16.msra.mxu0 %v986
    %1095 = vmatprep.subr.bf16.mxu0 0
    %1096 = vmatpush1.bf16.msra.mxu0 %v985
    %1097 = vmatprep.subr.bf16.mxu0 0
    %1098 = vmatpush2.bf16.msra.mxu0 %v1000
    %1099 = vmatprep.subr.bf16.mxu0 0
    %1100 = vmatpush2.bf16.msra.mxu0 %v999
    %1101 = vmatprep.subr.bf16.mxu0 0
    %1102 = vmatpush2.bf16.msra.mxu0 %v998
    %1103 = vmatprep.subr.bf16.mxu0 0
    %1104 = vmatpush2.bf16.msra.mxu0 %v997
    %1105 = vmatprep.subr.bf16.mxu0 0
    %1106 = vmatpush2.bf16.msra.mxu0 %v996
    %1107 = vmatprep.subr.bf16.mxu0 0
    %1108 = vmatpush2.bf16.msra.mxu0 %v995
    %1109 = vmatprep.subr.bf16.mxu0 0
    %1110 = vmatpush2.bf16.msra.mxu0 %v994
    %1111 = vmatprep.subr.bf16.mxu0 0
    %1112 = vmatpush2.bf16.msra.mxu0 %v993
    %1113 = vmatprep.mubr.bf16.mxu0 %v692
    %1114 = vmatmul.mubr.bf16.gmra.mxu0 %v691
    %v1115 = vpop.f32.mrf.mxu0
    %v1116 = vadd.f32 0.0, %v1115
    %v1117 = vpop.f32.mrf.mxu0
    %v1118 = vpop.f32.mrf.mxu0
    %v1119 = vpop.f32.mrf.mxu0
    %1120 = vdwg.mxu0
    %1121 = vmatprep.subr.bf16.mxu0 0
    %1122 = vmatpush1.bf16.msra.mxu0 %v1008
    %1123 = vmatprep.subr.bf16.mxu0 0
    %1124 = vmatpush1.bf16.msra.mxu0 %v1007
    %1125 = vmatprep.subr.bf16.mxu0 0
    %1126 = vmatpush1.bf16.msra.mxu0 %v1006
    %1127 = vmatprep.subr.bf16.mxu0 0
    %1128 = vmatpush1.bf16.msra.mxu0 %v1005
    %1129 = vmatprep.subr.bf16.mxu0 0
    %1130 = vmatpush1.bf16.msra.mxu0 %v1004
    %1131 = vmatprep.subr.bf16.mxu0 0
    %1132 = vmatpush1.bf16.msra.mxu0 %v1003
    %1133 = vmatprep.subr.bf16.mxu0 0
    %1134 = vmatpush1.bf16.msra.mxu0 %v1002
    %1135 = vmatprep.subr.bf16.mxu0 0
    %1136 = vmatpush1.bf16.msra.mxu0 %v1001
    %1137 = vmatprep.subr.bf16.mxu0 0
    %1138 = vmatpush2.bf16.msra.mxu0 %v1016
    %1139 = vmatprep.subr.bf16.mxu0 0
    %1140 = vmatpush2.bf16.msra.mxu0 %v1015
    %1141 = vmatprep.subr.bf16.mxu0 0
    %1142 = vmatpush2.bf16.msra.mxu0 %v1014
    %1143 = vmatprep.subr.bf16.mxu0 0
    %1144 = vmatpush2.bf16.msra.mxu0 %v1013
    %1145 = vmatprep.subr.bf16.mxu0 0
    %1146 = vmatpush2.bf16.msra.mxu0 %v1012
    %1147 = vmatprep.subr.bf16.mxu0 0
    %1148 = vmatpush2.bf16.msra.mxu0 %v1011
    %1149 = vmatprep.subr.bf16.mxu0 0
    %1150 = vmatpush2.bf16.msra.mxu0 %v1010
    %1151 = vmatprep.subr.bf16.mxu0 0
    %1152 = vmatpush2.bf16.msra.mxu0 %v1009
    %1153 = vmatprep.mubr.bf16.mxu0 %v694
    %1154 = vmatmul.mubr.bf16.gmra.mxu0 %v693
    %v1155 = vpop.f32.mrf.mxu0
    %v1156 = vadd.f32 %v1116, %v1155
    %v1157 = vpop.f32.mrf.mxu0
    %v1158 = vpop.f32.mrf.mxu0
    %v1159 = vpop.f32.mrf.mxu0
    %1160 = vdwg.mxu0
    %1161 = vmatprep.subr.bf16.mxu0 0
    %1162 = vmatpush1.bf16.msra.mxu0 %v1024
    %1163 = vmatprep.subr.bf16.mxu0 0
    %1164 = vmatpush1.bf16.msra.mxu0 %v1023
    %1165 = vmatprep.subr.bf16.mxu0 0
    %1166 = vmatpush1.bf16.msra.mxu0 %v1022
    %1167 = vmatprep.subr.bf16.mxu0 0
    %1168 = vmatpush1.bf16.msra.mxu0 %v1021
    %1169 = vmatprep.subr.bf16.mxu0 0
    %1170 = vmatpush1.bf16.msra.mxu0 %v1020
    %1171 = vmatprep.subr.bf16.mxu0 0
    %1172 = vmatpush1.bf16.msra.mxu0 %v1019
    %1173 = vmatprep.subr.bf16.mxu0 0
    %1174 = vmatpush1.bf16.msra.mxu0 %v1018
    %1175 = vmatprep.subr.bf16.mxu0 0
    %1176 = vmatpush1.bf16.msra.mxu0 %v1017
    %1177 = vmatprep.subr.bf16.mxu0 0
    %1178 = vmatpush2.bf16.msra.mxu0 %v1032
    %1179 = vmatprep.subr.bf16.mxu0 0
    %1180 = vmatpush2.bf16.msra.mxu0 %v1031
    %1181 = vmatprep.subr.bf16.mxu0 0
    %1182 = vmatpush2.bf16.msra.mxu0 %v1030
    %1183 = vmatprep.subr.bf16.mxu0 0
    %1184 = vmatpush2.bf16.msra.mxu0 %v1029
    %1185 = vmatprep.subr.bf16.mxu0 0
    %1186 = vmatpush2.bf16.msra.mxu0 %v1028
    %1187 = vmatprep.subr.bf16.mxu0 0
    %1188 = vmatpush2.bf16.msra.mxu0 %v1027
    %1189 = vmatprep.subr.bf16.mxu0 0
    %1190 = vmatpush2.bf16.msra.mxu0 %v1026
    %1191 = vmatprep.subr.bf16.mxu0 0
    %1192 = vmatpush2.bf16.msra.mxu0 %v1025
    %1193 = vmatprep.mubr.bf16.mxu0 %v696
    %1194 = vmatmul.mubr.bf16.gmra.mxu0 %v695
    %v1195 = vpop.f32.mrf.mxu0
    %v1196 = vadd.f32 %v1156, %v1195
    %v1197 = vpop.f32.mrf.mxu0
    %v1198 = vpop.f32.mrf.mxu0
    %v1199 = vpop.f32.mrf.mxu0
    %1200 = vdwg.mxu0
    %v1201 = vadd.f32 %v647, %v1196
    %1202 = vst [vmem:[#allocation13] sm:$0xff] %v1201
    // Predicated region
    $region44: #{tpu_custom_call.1} parent=1 // pred_check
      _
    $region45: #{tpu_custom_call.1} parent=1 // pred_check_branch
      %1204 = sbr.rel (0) target = $region47
    $region46: #{tpu_custom_call.1} parent=1 // pred_region
      %s1206 = ssub.s32 128, 128
      %1207 = vsyncadd [#allocation9], %s1206
      %s1209 = sshll.u32 [#allocation13], 4
      %s1210 = int_to_ptr.vmem [resolvable:$true] %s1209
      %1212 = dma.vmem_to_hbm [thread:$0]  %s1210, 128, %s7, [#allocation9]
    $region47: #{tpu_custom_call.1} parent=1 // pred_fallthru
      _
    // Predicated region
    $region48: #{tpu_custom_call.1} parent=1 // pred_check
      _
    $region49: #{tpu_custom_call.1} parent=1 // pred_check_branch
      %1214 = sbr.rel (0) target = $region51
    $region50: #{tpu_custom_call.1} parent=1 // pred_region
      %1215 = dma.done [#allocation9], 128
    $region51: #{tpu_custom_call.1} parent=1 // pred_fallthru
      _
    %1216 = vsyncpa [#allocation8], 1
    %1217 = vsyncpa [#allocation11], 1
    %1218 = vsyncpa [#allocation9], 1
  %1219 = vsyncmov [#allocation3]
  %s1220 = vpop.sfrf %1219
  %p1221 = scmp.eq.s32.totalorder %s1220, 0
  %p1222 = pneg %p1221
  %1224 = shalt.err (%p1222)
  %s1225 = scalar_lea.sflag [#allocation3], 1
  %1226 = vsyncmov %s1225
  %s1227 = vpop.sfrf %1226
  %p1228 = scmp.eq.s32.totalorder %s1227, 0
  %p1229 = pneg %p1228
  %1231 = shalt.err (%p1229)
  %s1232 = scalar_lea.sflag [#allocation3], 2
  %1233 = vsyncmov %s1232
  %s1234 = vpop.sfrf %1233
  %p1235 = scmp.eq.s32.totalorder %s1234, 0
  %p1236 = pneg %p1235
  %1238 = shalt.err (%p1236)
  %s1239 = scalar_lea.sflag [#allocation3], 3
  %1240 = vsyncmov %s1239
  %s1241 = vpop.sfrf %1240
  %p1242 = scmp.eq.s32.totalorder %s1241, 0
  %p1243 = pneg %p1242
  %1245 = shalt.err (%p1243)
  %s1246 = scalar_lea.sflag [#allocation3], 4
  %1247 = vsyncmov %s1246
  %s1248 = vpop.sfrf %1247
  %p1249 = scmp.eq.s32.totalorder %s1248, 0
  %p1250 = pneg %p1249
  %1252 = shalt.err (%p1250)
  %s1253 = scalar_lea.sflag [#allocation3], 5
  %1254 = vsyncmov %s1253
  %s1255 = vpop.sfrf %1254
  %p1256 = scmp.eq.s32.totalorder %s1255, 0
  %p1257 = pneg %p1256
  %1259 = shalt.err (%p1257)
  %s1260 = scalar_lea.sflag [#allocation3], 6
  %1261 = vsyncmov %s1260
  %s1262 = vpop.sfrf %1261
  %p1263 = scmp.eq.s32.totalorder %s1262, 0
  %p1264 = pneg %p1263
  %1266 = shalt.err (%p1264)
  %s1267 = scalar_lea.sflag [#allocation3], 7
  %1268 = vsyncmov %s1267
  %s1269 = vpop.sfrf %1268
  %p1270 = scmp.eq.s32.totalorder %s1269, 0
  %p1271 = pneg %p1270
  %1273 = shalt.err (%p1271)
  %s1274 = scalar_lea.sflag [#allocation3], 8
  %1275 = vsyncmov %s1274
  %s1276 = vpop.sfrf %1275
  %p1277 = scmp.eq.s32.totalorder %s1276, 0
  %p1278 = pneg %p1277
  %1280 = shalt.err (%p1278)
  %s1281 = scalar_lea.sflag [#allocation3], 9
  %1282 = vsyncmov %s1281
  %s1283 = vpop.sfrf %1282
  %p1284 = scmp.eq.s32.totalorder %s1283, 0
  %p1285 = pneg %p1284
  %1287 = shalt.err (%p1285)
  %s1288 = scalar_lea.sflag [#allocation3], 10
  %1289 = vsyncmov %s1288
  %s1290 = vpop.sfrf %1289
  %p1291 = scmp.eq.s32.totalorder %s1290, 0
  %p1292 = pneg %p1291
  %1294 = shalt.err (%p1292)
  %s1295 = scalar_lea.sflag [#allocation3], 11
  %1296 = vsyncmov %s1295
  %s1297 = vpop.sfrf %1296
  %p1298 = scmp.eq.s32.totalorder %s1297, 0
  %p1299 = pneg %p1298
  %1301 = shalt.err (%p1299)
  %s1302 = scalar_lea.sflag [#allocation3], 12
  %1303 = vsyncmov %s1302
  %s1304 = vpop.sfrf %1303
  %p1305 = scmp.eq.s32.totalorder %s1304, 0
  %p1306 = pneg %p1305
  %1308 = shalt.err (%p1306)
  %s1309 = scalar_lea.sflag [#allocation3], 13
  %1310 = vsyncmov %s1309
  %s1311 = vpop.sfrf %1310
  %p1312 = scmp.eq.s32.totalorder %s1311, 0
  %p1313 = pneg %p1312
  %1315 = shalt.err (%p1313)
  %s1316 = scalar_lea.sflag [#allocation3], 14
  %1317 = vsyncmov %s1316
  %s1318 = vpop.sfrf %1317
  %p1319 = scmp.eq.s32.totalorder %s1318, 0
  %p1320 = pneg %p1319
  %1322 = shalt.err (%p1320)
  %s1323 = scalar_lea.sflag [#allocation3], 15
  %1324 = vsyncmov %s1323
  %s1325 = vpop.sfrf %1324
  %p1326 = scmp.eq.s32.totalorder %s1325, 0
  %p1327 = pneg %p1326
  %1329 = shalt.err (%p1327)

</llo_original>
